<compile_context>
chip_gen: v5e
topology: v5e:2x2
jax: 0.10.0
libtpu: 0.0.40
codegen_flags: <defaults>
</compile_context>

<pallas_src>
import functools
import math

import jax
import jax.numpy as jnp
import numpy as np
from jax.experimental import pallas as pl
from jax.experimental.pallas import tpu as pltpu

_LANE = 128
_SUB_BF16 = 16   # bf16 sublane packing
_SUB_F32 = 8


def _round_up(x, m):
    return (x + m - 1) // m * m


# Bias-slab row indices (step kernel).
_B_A1, _B_A2, _B_C1, _B_C2, _B_IH, _B_HH, _B_O = range(7)
_N_STEP_BIAS_ROWS = 8
# Bias-slab row indices (key-precompute kernel).
_B_K1, _B_K2 = 0, 1
_N_KEY_BIAS_ROWS = 8


def _step_slab_layout(H, O):
    """Row-block layout of the packed bf16 per-step weight slab (pre-transposed)."""
    Hg = _round_up(H, _LANE)          # lane-aligned GRU gate stride
    blocks = [
        ("wa1", 2 * H, 2 * H),        # attn    Linear(2H -> 2H), transposed
        ("wa2", 2 * H, H),            # attn    Linear(2H -> H)
        ("wc1", 2 * H, 2 * H),        # combine Linear(2H -> 2H)
        ("wc2", 2 * H, H),            # combine Linear(2H -> H)
        ("wih", H, 3 * Hg),           # GRU W_ih fused, gates in 128-aligned blocks
        ("whh", H, 3 * Hg),           # GRU W_hh fused
        ("wo", H, O),                 # output  Linear(H -> O)
    ]
    C = _round_up(max(c for _, _, c in blocks), _LANE)
    offs, r = {}, 0
    for name, rows, cols in blocks:
        offs[name] = (r, rows, cols)
        r += _round_up(rows, _SUB_BF16)
    return offs, _round_up(r, _SUB_BF16), C, Hg


def _key_slab_layout(H):
    stride = _round_up(H, _SUB_BF16)
    offs = {"wk1": (0, H, H), "wk2": (stride, H, H)}
    return offs, _round_up(2 * stride, _SUB_BF16), _round_up(H, _LANE)


def _vmem():
    return pl.BlockSpec(memory_space=pltpu.MemorySpace.VMEM)


def _compiler_params(byte_hint):
    limit = int(min(max(4 * byte_hint, 8 * 1024 * 1024), 100 * 1024 * 1024))
    return pltpu.CompilerParams(vmem_limit_bytes=limit)


# ---------------------------------------------------------------------------
# Kernels
# ---------------------------------------------------------------------------
def _make_key_kernel(H, L, Bp, koffs):
    f32, bf16 = jnp.float32, jnp.bfloat16

    def kernel(enc_ref, w_ref, b_ref, key_ref):
        enc2 = enc_ref[...].reshape(Bp * L, H)       # free leading-dim merge

        def W(name):
            r0, rows, cols = koffs[name]
            return w_ref[r0:r0 + rows, :cols]

        k1 = (jnp.dot(enc2, W("wk1"), preferred_element_type=f32)
              + b_ref[_B_K1:_B_K1 + 1, :H])
        k1 = jnp.maximum(k1, 0.01 * k1)              # LeakyReLU
        key = (jnp.dot(k1.astype(bf16), W("wk2"), preferred_element_type=f32)
               + b_ref[_B_K2:_B_K2 + 1, :H])
        key_ref[...] = key.reshape(Bp, L, H).astype(bf16)

    return kernel


def _make_step_kernel(H, O, L, Bp, offs, Hg, Cout):
    f32, bf16 = jnp.float32, jnp.bfloat16

    def kernel(emb_ref, hid_ref, enc_ref, key_ref, w_ref, b_ref, out_ref):
        emb = emb_ref[...]                          # (Bp, H)  f32
        hid = hid_ref[...]                          # (Bp, H)  f32
        enc = enc_ref[...].astype(f32)              # (Bp, L, H)
        key = key_ref[...].astype(f32)              # (Bp, L, H) precomputed

        def W(name):
            r0, rows, cols = offs[name]
            return w_ref[r0:r0 + rows, :cols]

        def bias(row, cols):
            return b_ref[row:row + 1, :cols]        # (1, cols) broadcasts over Bp

        def mm(x, name):                            # bf16 MXU dot, f32 accumulate
            return jnp.dot(x.astype(bf16), W(name), preferred_element_type=f32)

        def leaky(t):
            return jnp.maximum(t, 0.01 * t)

        # ---- attention query from cat(embedded, hidden)
        eh = jnp.concatenate([emb, hid], axis=1)                       # (Bp, 2H)
        q1 = leaky(mm(eh, "wa1") + bias(_B_A1, 2 * H))
        q = mm(q1, "wa2") + bias(_B_A2, H)                             # (Bp, H)

        # ---- scores / softmax in lane-dense (Bp, L) layout (softmax over L)
        scores = jnp.sum(q[:, None, :] * key, axis=-1)                 # (Bp, L)
        m = jnp.max(scores, axis=-1, keepdims=True)
        e = jnp.exp(scores - m)
        denom = jnp.sum(e, axis=-1, keepdims=True)
        attn_w = e * pl.reciprocal(denom, approx=True)                 # (Bp, L)

        # ---- attention-weighted encoder values
        attn_applied = jnp.sum(attn_w[:, :, None] * enc, axis=1)       # (Bp, H)

        # ---- attn_combine -> ReLU
        ea = jnp.concatenate([emb, attn_applied], axis=1)              # (Bp, 2H)
        c1 = leaky(mm(ea, "wc1") + bias(_B_C1, 2 * H))
        x = jnp.maximum(mm(c1, "wc2") + bias(_B_C2, H), 0.0)           # (Bp, H)

        # ---- single GRU step; gates r|z|n live in lane-aligned blocks
        gi = mm(x, "wih") + bias(_B_IH, 3 * Hg)
        gh = mm(hid, "whh") + bias(_B_HH, 3 * Hg)
        r = jax.nn.sigmoid(gi[:, 0:H] + gh[:, 0:H])
        z = jax.nn.sigmoid(gi[:, Hg:Hg + H] + gh[:, Hg:Hg + H])
        n = jnp.tanh(gi[:, 2 * Hg:2 * Hg + H] + r * gh[:, 2 * Hg:2 * Hg + H])
        h_new = (1.0 - z) * n + z * hid                                # (Bp, H)

        # ---- output projection + single lane-dense packed store
        out = mm(h_new, "wo") + bias(_B_O, O)                          # (Bp, O)
        pieces = [out, h_new, attn_w]
        pad = Cout - (O + H + L)
        if pad:
            pieces.append(jnp.zeros((Bp, pad), f32))
        out_ref[...] = jnp.concatenate(pieces, axis=1)

    return kernel


# ---------------------------------------------------------------------------
# Parameter setup (deterministic, PyTorch-style uniform init)
# ---------------------------------------------------------------------------
def init_params(key, hidden_size, output_size):
    H, O = hidden_size, output_size

    def linear(k, fin, fout):
        kw, kb = jax.random.split(k)
        bd = 1.0 / math.sqrt(fin)
        return (jax.random.uniform(kw, (fout, fin), jnp.float32, -bd, bd),
                jax.random.uniform(kb, (fout,), jnp.float32, -bd, bd))

    ks = jax.random.split(key, 11)
    p = {
        "attn1": linear(ks[0], 2 * H, 2 * H),
        "attn2": linear(ks[1], 2 * H, H),
        "key1": linear(ks[2], H, H),
        "key2": linear(ks[3], H, H),
        "comb1": linear(ks[4], 2 * H, 2 * H),
        "comb2": linear(ks[5], 2 * H, H),
        "out": linear(ks[6], H, O),
    }
    bd = 1.0 / math.sqrt(H)
    p["gru_w_ih"] = jax.random.uniform(ks[7], (3 * H, H), jnp.float32, -bd, bd)
    p["gru_w_hh"] = jax.random.uniform(ks[8], (3 * H, H), jnp.float32, -bd, bd)
    p["gru_b_ih"] = jax.random.uniform(ks[9], (3 * H,), jnp.float32, -bd, bd)
    p["gru_b_hh"] = jax.random.uniform(ks[10], (3 * H,), jnp.float32, -bd, bd)
    return p


def pack_params(p):
    """Pack weights into bf16 slabs + f32 bias slabs.  Call ONCE; reuse forever."""
    (Wa1, ba1), (Wa2, ba2) = p["attn1"], p["attn2"]
    (Wk1, bk1), (Wk2, bk2) = p["key1"], p["key2"]
    (Wc1, bc1), (Wc2, bc2) = p["comb1"], p["comb2"]
    Wo, bo = p["out"]
    H, O = int(Wk1.shape[0]), int(Wo.shape[0])

    offs, R, C, Hg = _step_slab_layout(H, O)
    w = jnp.zeros((R, C), jnp.float32)

    def put(slab, name, mat):
        r0, rows, cols = offs[name]
        return slab.at[r0:r0 + rows, :cols].set(mat.astype(jnp.float32))

    w = put(w, "wa1", Wa1.T)
    w = put(w, "wa2", Wa2.T)
    w = put(w, "wc1", Wc1.T)
    w = put(w, "wc2", Wc2.T)
    w = put(w, "wo", Wo.T)

    wih = jnp.zeros((H, 3 * Hg), jnp.float32)
    whh = jnp.zeros((H, 3 * Hg), jnp.float32)
    for g in range(3):      # PyTorch gate order r, z, n; lane-aligned blocks
        wih = wih.at[:, g * Hg:g * Hg + H].set(p["gru_w_ih"][g * H:(g + 1) * H, :].T)
        whh = whh.at[:, g * Hg:g * Hg + H].set(p["gru_w_hh"][g * H:(g + 1) * H, :].T)
    w = put(w, "wih", wih)
    w = put(w, "whh", whh)

    b = jnp.zeros((_N_STEP_BIAS_ROWS, C), jnp.float32)

    def putb(slab, row, vec, col0=0):
        return slab.at[row, col0:col0 + vec.shape[0]].set(vec.astype(jnp.float32))

    b = putb(b, _B_A1, ba1)
    b = putb(b, _B_A2, ba2)
    b = putb(b, _B_C1, bc1)
    b = putb(b, _B_C2, bc2)
    b = putb(b, _B_O, bo)
    for g in range(3):
        b = putb(b, _B_IH, p["gru_b_ih"][g * H:(g + 1) * H], g * Hg)
        b = putb(b, _B_HH, p["gru_b_hh"][g * H:(g + 1) * H], g * Hg)

    koffs, KR, KC = _key_slab_layout(H)
    wk = jnp.zeros((KR, KC), jnp.float32)
    wk = wk.at[koffs["wk1"][0]:koffs["wk1"][0] + H, :H].set(Wk1.T.astype(jnp.float32))
    wk = wk.at[koffs["wk2"][0]:koffs["wk2"][0] + H, :H].set(Wk2.T.astype(jnp.float32))
    bk = jnp.zeros((_N_KEY_BIAS_ROWS, KC), jnp.float32)
    bk = bk.at[_B_K1, :H].set(bk1.astype(jnp.float32))
    bk = bk.at[_B_K2, :H].set(bk2.astype(jnp.float32))

    return {"w": jax.device_put(w.astype(jnp.bfloat16)),
            "b": jax.device_put(b),
            "wk": jax.device_put(wk.astype(jnp.bfloat16)),
            "bk": jax.device_put(bk),
            "H": H, "O": O}


# ---------------------------------------------------------------------------
# Cached pallas_call builders (no per-step retrace / re-lowering)
# ---------------------------------------------------------------------------
@functools.lru_cache(maxsize=None)
def _build_precompute(H, L, B):
    Bp = _round_up(B, _SUB_F32)
    koffs, KR, KC = _key_slab_layout(H)
    kernel = _make_key_kernel(H, L, Bp, koffs)
    byte_hint = 2 * Bp * L * H * 2 + KR * KC * 2 + _N_KEY_BIAS_ROWS * KC * 4
    call = pl.pallas_call(
        kernel,
        out_shape=jax.ShapeDtypeStruct((Bp, L, H), jnp.bfloat16),
        in_specs=[_vmem(), _vmem(), _vmem()],
        out_specs=_vmem(),
        compiler_params=_compiler_params(byte_hint),
    )

    def fn(enc, wk, bk):
        if Bp != B:                                   # pad batch once per sequence
            enc = jnp.pad(enc, ((0, 0), (0, Bp - B), (0, 0)))
        enc_bt = jnp.transpose(enc, (1, 0, 2)).astype(jnp.bfloat16)   # (Bp, L, H)
        key_bt = call(enc_bt, wk, bk)
        return enc_bt, key_bt

    return jax.jit(fn), Bp


@functools.lru_cache(maxsize=None)
def _build_step(H, O, L, B, Bp):
    offs, R, C, Hg = _step_slab_layout(H, O)
    Cout = _round_up(O + H + L, _LANE)
    kernel = _make_step_kernel(H, O, L, Bp, offs, Hg, Cout)
    byte_hint = (2 * Bp * H * 4 + 2 * Bp * L * H * 2 + R * C * 2
                 + _N_STEP_BIAS_ROWS * C * 4 + Bp * Cout * 4)
    call = pl.pallas_call(
        kernel,
        out_shape=jax.ShapeDtypeStruct((Bp, Cout), jnp.float32),
        in_specs=[_vmem()] * 6,
        out_specs=_vmem(),
        compiler_params=_compiler_params(byte_hint),
    )

    def fn(emb, hid, enc_bt, key_bt, w, b):
        if Bp != B:
            pad = ((0, Bp - B), (0, 0))
            emb = jnp.pad(emb, pad)
            hid = jnp.pad(hid, pad)
        slab = call(emb, hid, enc_bt, key_bt, w, b)
        out = slab[:B, :O]
        h_new = slab[:B, O:O + H]
        attn_w = jnp.transpose(slab[:B, O + H:O + H + L])   # -> (L, B)
        return out, h_new[None], attn_w

    return jax.jit(fn)


# ---------------------------------------------------------------------------
# Public wrappers
# ---------------------------------------------------------------------------
def precompute_encoder(encoder_outputs, packed):
    """Once per sequence: pad/transpose encoder outputs and run attn_key."""
    L, B, H = (int(s) for s in encoder_outputs.shape)
    fn, Bp = _build_precompute(H, L, B)
    enc_bt, key_bt = fn(encoder_outputs, packed["wk"], packed["bk"])
    return {"enc": enc_bt, "key": key_bt, "B": B, "Bp": Bp, "L": L}


def attn_decoder_step(last_tok, hidden, pre, packed):
    """One decoder step using a precomputed encoder context."""
    fn = _build_step(packed["H"], packed["O"], pre["L"], pre["B"], pre["Bp"])
    return fn(last_tok[0], hidden[0], pre["enc"], pre["key"], packed["w"], packed["b"])


def attn_decoder_forward(last_tok, hidden, encoder_outputs, packed):
    """forward() semantics of the PyTorch module (one step)."""
    pre = precompute_encoder(encoder_outputs, packed)
    return attn_decoder_step(last_tok, hidden, pre, packed)


# ---------------------------------------------------------------------------
# Pure-JAX f32 reference (mirrors the PyTorch forward) for correctness checking
# ---------------------------------------------------------------------------
def reference_forward(last_tok, hidden, enc, p):
    lin = lambda x, wb: x @ wb[0].T + wb[1]
    seq2 = lambda x, a, b: lin(jax.nn.leaky_relu(lin(x, a), 0.01), b)
    emb, hid = last_tok[0], hidden[0]
    H = hid.shape[1]
    attn_query = seq2(jnp.concatenate([emb, hid], 1), p["attn1"], p["attn2"])
    key = seq2(enc, p["key1"], p["key2"])
    attn_w = jax.nn.softmax((attn_query[None] * key).sum(-1), axis=0)
    attn_applied = jnp.einsum("lb,lbh->bh", attn_w, enc)
    x = jax.nn.relu(seq2(jnp.concatenate([emb, attn_applied], 1), p["comb1"], p["comb2"]))
    gi = x @ p["gru_w_ih"].T + p["gru_b_ih"]
    gh = hid @ p["gru_w_hh"].T + p["gru_b_hh"]
    r = jax.nn.sigmoid(gi[:, :H] + gh[:, :H])
    z = jax.nn.sigmoid(gi[:, H:2 * H] + gh[:, H:2 * H])
    n = jnp.tanh(gi[:, 2 * H:] + r * gh[:, 2 * H:])
    h_new = (1.0 - z) * n + z * hid
    return lin(h_new, p["out"]), h_new[None], attn_w


if __name__ == "__main__":
    H, O, B, L = 32, 16, 4, 8
    key = jax.random.PRNGKey(0)
    kp, k1, k2, k3 = jax.random.split(key, 4)

    params = init_params(kp, H, O)
    packed = pack_params(params)          # packed ONCE; reused every step

    last_tok = jax.random.normal(k1, (1, B, H), jnp.float32)
    hidden = jax.random.normal(k2, (1, B, H), jnp.float32)
    encoder_outputs = jax.random.normal(k3, (L, B, H), jnp.float32)

    out, h_new, attn_w = attn_decoder_forward(last_tok, hidden, encoder_outputs, packed)
    jax.block_until_ready((out, h_new, attn_w))

    ro, rh, ra = reference_forward(last_tok, hidden, encoder_outputs, params)
    # bf16 MXU operands -> tolerance reflects bf16 matmul precision.
    np.testing.assert_allclose(np.asarray(out), np.asarray(ro), atol=5e-2, rtol=5e-2)
    np.testing.assert_allclose(np.asarray(h_new), np.asarray(rh), atol=5e-2, rtol=5e-2)
    np.testing.assert_allclose(np.asarray(attn_w), np.asarray(ra), atol=5e-2, rtol=5e-2)
    print("KERNEL_OK")
</pallas_src>

<mosaic_0001>
module attributes {stable_mosaic.version = 11 : i64} {
  func.func @kernel(%arg0: memref<8x8x32xbf16, #tpu.memory_space<vmem>>, %arg1: memref<64x128xbf16, #tpu.memory_space<vmem>>, %arg2: memref<8x128xf32, #tpu.memory_space<vmem>>, %arg3: memref<8x8x32xbf16, #tpu.memory_space<vmem>>) attributes {dimension_semantics = [], scalar_prefetch = 0 : i64, scratch_operands = 0 : i64, tpu.core_type = #tpu.core_type<tc>} {
    %c0 = arith.constant 0 : index
    %c0_0 = arith.constant 0 : index
    %c0_1 = arith.constant 0 : index
    %0 = vector.load %arg0[%c0, %c0_0, %c0_1] : memref<8x8x32xbf16, #tpu.memory_space<vmem>>, vector<8x8x32xbf16>
    %1 = vector.shape_cast %0 : vector<8x8x32xbf16> to vector<64x32xbf16>
    %c0_2 = arith.constant 0 : index
    %c0_3 = arith.constant 0 : index
    %2 = vector.load %arg1[%c0_2, %c0_3] : memref<64x128xbf16, #tpu.memory_space<vmem>>, vector<32x32xbf16>
    %cst = arith.constant dense<0.000000e+00> : vector<64x32xf32>
    %3 = tpu.matmul %1, %2, %cst {dimension_numbers = #tpu.dot_dimension_numbers<[1], [0], [0], [1], [0, 0, 1, 1], [], []>} : vector<64x32xbf16>, vector<32x32xbf16>, vector<64x32xf32> -> vector<64x32xf32>
    %c0_4 = arith.constant 0 : index
    %c0_5 = arith.constant 0 : index
    %4 = vector.load %arg2[%c0_4, %c0_5] : memref<8x128xf32, #tpu.memory_space<vmem>>, vector<1x32xf32>
    %5 = vector.broadcast %4 : vector<1x32xf32> to vector<64x32xf32>
    %6 = arith.addf %3, %5 : vector<64x32xf32>
    %cst_6 = arith.constant 0.00999999977 : f32
    %7 = vector.broadcast %cst_6 : f32 to vector<64x32xf32>
    %8 = arith.mulf %7, %6 : vector<64x32xf32>
    %9 = arith.maximumf %6, %8 : vector<64x32xf32>
    %10 = arith.truncf %9 : vector<64x32xf32> to vector<64x32xbf16>
    %c32 = arith.constant 32 : index
    %c0_7 = arith.constant 0 : index
    %11 = vector.load %arg1[%c32, %c0_7] : memref<64x128xbf16, #tpu.memory_space<vmem>>, vector<32x32xbf16>
    %cst_8 = arith.constant dense<0.000000e+00> : vector<64x32xf32>
    %12 = tpu.matmul %10, %11, %cst_8 {dimension_numbers = #tpu.dot_dimension_numbers<[1], [0], [0], [1], [0, 0, 1, 1], [], []>} : vector<64x32xbf16>, vector<32x32xbf16>, vector<64x32xf32> -> vector<64x32xf32>
    %c1 = arith.constant 1 : index
    %c0_9 = arith.constant 0 : index
    %13 = vector.load %arg2[%c1, %c0_9] : memref<8x128xf32, #tpu.memory_space<vmem>>, vector<1x32xf32>
    %14 = vector.broadcast %13 : vector<1x32xf32> to vector<64x32xf32>
    %15 = arith.addf %12, %14 : vector<64x32xf32>
    %16 = vector.shape_cast %15 : vector<64x32xf32> to vector<8x8x32xf32>
    %17 = arith.truncf %16 : vector<8x8x32xf32> to vector<8x8x32xbf16>
    %c0_10 = arith.constant 0 : index
    %c0_11 = arith.constant 0 : index
    %c0_12 = arith.constant 0 : index
    %18 = vector.load %arg3[%c0_10, %c0_11, %c0_12] : memref<8x8x32xbf16, #tpu.memory_space<vmem>>, vector<8x8x32xbf16>
    tpu.vector_store %arg3[%c0_10, %c0_11, %c0_12], %17 {strides = array<i32>} : memref<8x8x32xbf16, #tpu.memory_space<vmem>>, vector<8x8x32xbf16>,
    return
  }
}

</mosaic_0001>

<llo_original>
// kernel: fn.1
$region0: #{fn.1}
  #allocation0 [shape = 'u32[]', space=smem, size = 0x4, offset = 0x4, fixed_abs, tag = 'smem constant byte address 0x4 - core index']
  #allocation1 [shape = 'u32[72,128]{1,0:T(1,128)}', space=vmem, size = 0x9000, scoped, tag = 'internal scratch']
  %s0 = inlined_call_operand.vmem [shape: bf16[8,8,32], index: 0, kind: input, shape index: {}]
  %s1 = inlined_call_operand.vmem [shape: bf16[64,128], index: 1, kind: input, shape index: {}]
  %s2 = inlined_call_operand.vmem [shape: f32[8,128], index: 2, kind: input, shape index: {}]
  %s3 = inlined_call_operand.hbm [shape: bf16[8,8,32], index: 3, kind: output, shape index: {}]
  %s4 = sld [smem:[#allocation0]]
  $region22: #{fn.1} parent=0
    _
  %s6 = ssub.s32 1, %s4
  %s7 = scalar_select 0, %s6, %s4
  $region1: #{fn.1} parent=0
    #allocation2 [shape = 'u8[16384]{0}', space=vmem, size = 0x4000, scoped, tag = 'output window, operand 0, single buffered']
    #allocation3 [shape = 's32[1]{0}', space=sflag, size = 0x4, scoped, tag = 'scoped memory for fn.1']
    %8 = vsyncpa [#allocation3], 0
    // Predicated region
    $region2: #{fn.1} parent=1 // pred_check
      _
    $region3: #{fn.1} parent=1 // pred_check_branch
      %10 = sbr.rel (0) target = $region5
    $region4: #{fn.1} parent=1 // pred_region
      _
    $region5: #{fn.1} parent=1 // pred_fallthru
      _
    // Predicated region
    $region6: #{fn.1} parent=1 // pred_check
      _
    $region7: #{fn.1} parent=1 // pred_check_branch
      %12 = sbr.rel (0) target = $region9
    $region8: #{fn.1} parent=1 // pred_region
      _
    $region9: #{fn.1} parent=1 // pred_fallthru
      _
    // Predicated region
    $region10: #{fn.1} parent=1 // pred_check
      _
    $region11: #{fn.1} parent=1 // pred_check_branch
      %14 = sbr.rel (0) target = $region13
    $region12: #{fn.1} parent=1 // pred_region
      _
    $region13: #{fn.1} parent=1 // pred_fallthru
      _
    %v16 = vld [vmem:[%s0] sm:$0xf]
    %v17 = vld [vmem:[%s0 + $0x4] sm:$0xf]
    %v18 = vld [vmem:[%s0 + $0x8] sm:$0xf]
    %v19 = vld [vmem:[%s0 + $0xc] sm:$0xf]
    %v20 = vld [vmem:[%s0 + $0x10] sm:$0xf]
    %v21 = vld [vmem:[%s0 + $0x14] sm:$0xf]
    %v22 = vld [vmem:[%s0 + $0x18] sm:$0xf]
    %v23 = vld [vmem:[%s0 + $0x1c] sm:$0xf]
    %v24 = vld [vmem:[%s1] sm:$0xf]
    %v25 = vld [vmem:[%s1 + $0x4] sm:$0xf]
    %v26 = vld [vmem:[%s1 + $0x8] sm:$0xf]
    %v27 = vld [vmem:[%s1 + $0xc] sm:$0xf]
    %v28 = vld [vmem:[%s2] sm:$0x1]
    %v29 = vperm.slane %v28, 0
    %v38 = vunpack.c.l.b16 %v16
    %v39 = vunpack.c.l.b16 %v17
    %v40 = vunpack.c.l.b16 %v18
    %v41 = vunpack.c.l.b16 %v19
    %v42 = vunpack.c.l.b16 %v20
    %v43 = vunpack.c.l.b16 %v21
    %v44 = vunpack.c.l.b16 %v22
    %v45 = vunpack.c.l.b16 %v23
    %v46 = vpack.c.b16 %v39, %v38
    %v47 = vpack.c.b16 %v41, %v40
    %v48 = vpack.c.b16 %v43, %v42
    %v49 = vpack.c.b16 %v45, %v44
    %v54 = vunpack.c.l.b16 %v24
    %v55 = vunpack.c.l.b16 %v25
    %v56 = vunpack.c.l.b16 %v26
    %v57 = vunpack.c.l.b16 %v27
    %v58 = vpack.c.b16 %v55, %v54
    %v59 = vpack.c.b16 %v57, %v56
    %vm62 = vcmask 261120
    %v64 = vsel %vm62, %v46, 0
    %v67 = vsel %vm62, %v47, 0
    %v70 = vsel %vm62, %v48, 0
    %v73 = vsel %vm62, %v49, 0
    %75 = vmatpush.bf16.msra.mxu0 0
    %76 = vmatpush.bf16.msra.mxu0 0
    %77 = vmatpush.bf16.msra.mxu0 0
    %78 = vmatpush.bf16.msra.mxu0 0
    %79 = vmatpush.bf16.msra.mxu0 0
    %80 = vmatpush.bf16.msra.mxu0 0
    %81 = vmatpush.bf16.msra.mxu0 %v59
    %82 = vmatpush.bf16.msra.mxu0 %v58
    %83 = vmatmul.bf16.gmra.mxu0 %v64
    %v84 = vpop.f32.mrf.mxu0
    %v85 = vadd.f32 %v29, %v84
    %v86 = vpop.f32.mrf.mxu0
    %v87 = vadd.f32 %v29, %v86
    %88 = vmatmul.bf16.gmra.mxu0 %v67
    %v89 = vpop.f32.mrf.mxu0
    %v90 = vadd.f32 %v29, %v89
    %v91 = vpop.f32.mrf.mxu0
    %v92 = vadd.f32 %v29, %v91
    %93 = vmatmul.bf16.gmra.mxu0 %v70
    %v94 = vpop.f32.mrf.mxu0
    %v95 = vadd.f32 %v29, %v94
    %v96 = vpop.f32.mrf.mxu0
    %v97 = vadd.f32 %v29, %v96
    %98 = vmatmul.bf16.gmra.mxu0 %v73
    %v99 = vpop.f32.mrf.mxu0
    %v100 = vadd.f32 %v29, %v99
    %v101 = vpop.f32.mrf.mxu0
    %v102 = vadd.f32 %v29, %v101
    %103 = vdwg.mxu0
    %v104 = vmul.f32 %v85, 0.01
    %v105 = vmul.f32 %v87, 0.01
    %v106 = vmul.f32 %v90, 0.01
    %v107 = vmul.f32 %v92, 0.01
    %v108 = vmul.f32 %v95, 0.01
    %v109 = vmul.f32 %v97, 0.01
    %v110 = vmul.f32 %v100, 0.01
    %v111 = vmul.f32 %v102, 0.01
    %v112 = vmax.f32 %v85, %v104
    %v113 = vmax.f32 %v87, %v105
    %v114 = vmax.f32 %v90, %v106
    %v115 = vmax.f32 %v92, %v107
    %v116 = vmax.f32 %v95, %v108
    %v117 = vmax.f32 %v97, %v109
    %v118 = vmax.f32 %v100, %v110
    %v119 = vmax.f32 %v102, %v111
    %v120 = vpack.c.bf16 %v113, %v112
    %v121 = vpack.c.bf16 %v115, %v114
    %v122 = vpack.c.bf16 %v117, %v116
    %v123 = vpack.c.bf16 %v119, %v118
    %v124 = vld [vmem:[%s1 + $0x10] sm:$0xf]
    %v125 = vld [vmem:[%s1 + $0x14] sm:$0xf]
    %v126 = vld [vmem:[%s1 + $0x18] sm:$0xf]
    %v127 = vld [vmem:[%s1 + $0x1c] sm:$0xf]
    %v128 = vld [vmem:[%s2 + $0x1] sm:$0x1]
    %v129 = vperm.slane %v128, 0
    %v134 = vunpack.c.l.b16 %v124
    %v135 = vunpack.c.l.b16 %v125
    %v136 = vunpack.c.l.b16 %v126
    %v137 = vunpack.c.l.b16 %v127
    %v138 = vpack.c.b16 %v135, %v134
    %v139 = vpack.c.b16 %v137, %v136
    %v143 = vsel %vm62, %v120, 0
    %v146 = vsel %vm62, %v121, 0
    %v149 = vsel %vm62, %v122, 0
    %v152 = vsel %vm62, %v123, 0
    %154 = vmatpush.bf16.msra.mxu0 0
    %155 = vmatpush.bf16.msra.mxu0 0
    %156 = vmatpush.bf16.msra.mxu0 0
    %157 = vmatpush.bf16.msra.mxu0 0
    %158 = vmatpush.bf16.msra.mxu0 0
    %159 = vmatpush.bf16.msra.mxu0 0
    %160 = vmatpush.bf16.msra.mxu0 %v139
    %161 = vmatpush.bf16.msra.mxu0 %v138
    %162 = vmatmul.bf16.gmra.mxu0 %v143
    %v163 = vpop.f32.mrf.mxu0
    %v164 = vadd.f32 %v129, %v163
    %v165 = vpop.f32.mrf.mxu0
    %v166 = vadd.f32 %v129, %v165
    %167 = vmatmul.bf16.gmra.mxu0 %v146
    %v168 = vpop.f32.mrf.mxu0
    %v169 = vadd.f32 %v129, %v168
    %v170 = vpop.f32.mrf.mxu0
    %v171 = vadd.f32 %v129, %v170
    %172 = vmatmul.bf16.gmra.mxu0 %v149
    %v173 = vpop.f32.mrf.mxu0
    %v174 = vadd.f32 %v129, %v173
    %v175 = vpop.f32.mrf.mxu0
    %v176 = vadd.f32 %v129, %v175
    %177 = vmatmul.bf16.gmra.mxu0 %v152
    %v178 = vpop.f32.mrf.mxu0
    %v179 = vadd.f32 %v129, %v178
    %v180 = vpop.f32.mrf.mxu0
    %v181 = vadd.f32 %v129, %v180
    %182 = vdwg.mxu0
    %v183 = vpack.c.bf16 %v164, %v164
    %v184 = vpack.c.bf16 %v166, %v166
    %v185 = vpack.c.bf16 %v169, %v169
    %v186 = vpack.c.bf16 %v171, %v171
    %v187 = vpack.c.bf16 %v174, %v174
    %v188 = vpack.c.bf16 %v176, %v176
    %v189 = vpack.c.bf16 %v179, %v179
    %v190 = vpack.c.bf16 %v181, %v181
    %vm191 = vcmask 257024
    %192 = vst.msk [vmem:[#allocation2] sm:$0xf] %vm191, %v183
    %193 = vst.msk [vmem:[#allocation2 + $0x4] sm:$0xf] %vm191, %v184
    %194 = vst.msk [vmem:[#allocation2 + $0x8] sm:$0xf] %vm191, %v185
    %195 = vst.msk [vmem:[#allocation2 + $0xc] sm:$0xf] %vm191, %v186
    %196 = vst.msk [vmem:[#allocation2 + $0x10] sm:$0xf] %vm191, %v187
    %197 = vst.msk [vmem:[#allocation2 + $0x14] sm:$0xf] %vm191, %v188
    %198 = vst.msk [vmem:[#allocation2 + $0x18] sm:$0xf] %vm191, %v189
    %199 = vst.msk [vmem:[#allocation2 + $0x1c] sm:$0xf] %vm191, %v190
    // Predicated region
    $region14: #{fn.1} parent=1 // pred_check
      _
    $region15: #{fn.1} parent=1 // pred_check_branch
      %201 = sbr.rel (0) target = $region17
    $region16: #{fn.1} parent=1 // pred_region
      %203 = vsyncadd [#allocation3], 0
      %s204 = sshll.u32 [#allocation2], 4
      %s205 = int_to_ptr.vmem [resolvable:$true] %s204
      %s206 = sshll.u32 %s3, 4
      %s207 = int_to_ptr.hbm [resolvable:$true] %s206
      %212 = dma.vmem_to_hbm [thread:$0]  %s205, 512, %s207, [#allocation3], 64, 64, 4
    $region17: #{fn.1} parent=1 // pred_fallthru
      _
    // Predicated region
    $region18: #{fn.1} parent=1 // pred_check
      _
    $region19: #{fn.1} parent=1 // pred_check_branch
      %214 = sbr.rel (0) target = $region21
    $region20: #{fn.1} parent=1 // pred_region
      %216 = dma.done [#allocation3], 512
    $region21: #{fn.1} parent=1 // pred_fallthru
      _
    %217 = vsyncpa [#allocation3], 1

</llo_original>
